<compile_context>
chip_gen: v7x
topology: tpu7x:2x2x1
jax: 0.10.0
libtpu: 0.0.40
codegen_flags: <defaults>
</compile_context>

<pallas_src>
import jax
import jax.numpy as jnp
from jax.experimental import pallas as pl
from jax.experimental.pallas import tpu as pltpu

N_HIDDEN = 32
TILE_N = 8192          # batch tile on the lane axis (multiple of 128); sweep 4096/8192/16384


def mlp_kernel(x_ref, w1_ref, b1_ref, w2_ref, b2_ref, w3t_ref, b3_ref, o_ref):
    # x_ref: (2, TN)   rows = [t, s], batch on the lane axis
    x = x_ref[...]

    # ---- layer 1: W1(H,2) @ x(2,TN) + b1  == two rank-1 broadcast multiplies
    # (keep the K=2 contraction on the VPU; MXU would be 2/128 utilized)
    h1 = (w1_ref[:, 0:1] * x[0:1, :]
          + w1_ref[:, 1:2] * x[1:2, :]
          + b1_ref[...])                                   # (H, TN) f32
    h1 = jnp.maximum(h1, 0.0)

    # ---- layer 2: W2(H,H) @ h1(H,TN) + b2, ReLU ---------------------------
    # Single bf16 MXU pass (w2_ref already bf16), f32 accumulation.
    h2 = jnp.dot(w2_ref[...], h1.astype(jnp.bfloat16),
                 preferred_element_type=jnp.float32)       # (H, TN) f32
    h2 = jnp.maximum(h2 + b2_ref[...], 0.0)

    # ---- layer 3: (1,H) @ h2 == VPU multiply + sublane (XLU) reduce --------
    o_ref[...] = (jnp.sum(w3t_ref[...] * h2, axis=0, keepdims=True)
                  + b3_ref[...])                           # (1, TN)


def net_forward(t, s, params, tile_n=TILE_N):
    """t, s: (N, 1) float32. Returns (N, 1) float32 == PyTorch Net.forward."""
    w1, b1, w2, b2, w3t, b3 = params
    N = t.shape[0]

    # Lane-dense layout: batch along the last (lane) axis, single input stream.
    x = jnp.concatenate([t, s], axis=1).T.astype(jnp.float32)   # (2, N)

    # Single bf16 MXU pass for layer 2: pre-cast the (H, H) weight once.
    w2_bf16 = w2.astype(jnp.bfloat16)

    # ---- tile selection ----------------------------------------------------
    n128 = ((N + 127) // 128) * 128          # 128-lane aligned batch
    tn = min(tile_n, n128)
    # v7x megacore: keep >= 2 grid steps when the batch is big enough that a
    # split tile stays lane-dense (>= 1024 lanes per step).  Irrelevant (but
    # harmless) on single-TensorCore v5e/v6e.
    if n128 <= tile_n and n128 >= 2048:
        tn = ((n128 // 2 + 127) // 128) * 128
    n_pad = pl.cdiv(N, tn) * tn
    if n_pad != N:
        x = jnp.pad(x, ((0, 0), (0, n_pad - N)))
    grid = (n_pad // tn,)

    def full_spec(arr):
        # Full-array block, resident across all grid steps (constant index map).
        return pl.BlockSpec(arr.shape, lambda i: tuple(0 for _ in arr.shape))

    flops = 2 * (2 * N_HIDDEN + N_HIDDEN * N_HIDDEN + N_HIDDEN) * n_pad
    bytes_accessed = 12 * n_pad + sum(a.size * a.dtype.itemsize
                                      for a in (w1, b1, w2_bf16, b2, w3t, b3))

    out = pl.pallas_call(
        mlp_kernel,
        out_shape=jax.ShapeDtypeStruct((1, n_pad), jnp.float32),
        grid_spec=pltpu.PrefetchScalarGridSpec(
            num_scalar_prefetch=0,
            grid=grid,
            in_specs=[
                pl.BlockSpec((2, tn), lambda i: (0, i)),     # packed [t; s]
                full_spec(w1), full_spec(b1),
                full_spec(w2_bf16), full_spec(b2),
                full_spec(w3t), full_spec(b3),
            ],
            out_specs=pl.BlockSpec((1, tn), lambda i: (0, i)),
        ),
        compiler_params=pltpu.CompilerParams(
            dimension_semantics=("parallel",),               # megacore on v7x
            vmem_limit_bytes=32 * 1024 * 1024),              # v5e default is 16 MiB
        cost_estimate=pl.CostEstimate(flops=flops,
                                      transcendentals=0,
                                      bytes_accessed=bytes_accessed),
    )(x, w1, b1, w2_bf16, b2, w3t, b3)

    return out[:, :N].T                                      # (N, 1)


def init_params(key, n_hidden=N_HIDDEN):
    """PyTorch-style uniform(-1/sqrt(fan_in), +1/sqrt(fan_in)) init.

    Weights kept in torch's (out, in) layout; biases as (out, 1) columns;
    the last layer's weight is stored transposed as (H, 1) for the kernel.
    """
    def linear(key, fan_in, fan_out):
        kw, kb = jax.random.split(key)
        bound = 1.0 / jnp.sqrt(fan_in)
        w = jax.random.uniform(kw, (fan_out, fan_in), jnp.float32, -bound, bound)
        b = jax.random.uniform(kb, (fan_out, 1), jnp.float32, -bound, bound)
        return w, b

    k1, k2, k3 = jax.random.split(key, 3)
    w1, b1 = linear(k1, 2, n_hidden)          # (H, 2), (H, 1)
    w2, b2 = linear(k2, n_hidden, n_hidden)   # (H, H), (H, 1)
    w3, b3 = linear(k3, n_hidden, 1)          # (1, H), (1, 1)
    return (w1, b1, w2, b2, w3.T, b3)         # w3 stored as (H, 1)


def net_reference(t, s, params, bf16_layer2=False):
    """Plain-JAX reference of the PyTorch forward.

    bf16_layer2=True mirrors the kernel's single bf16 MXU pass for layer 2
    (f32 accumulation) so the kernel can be checked to tight tolerance.
    """
    w1, b1, w2, b2, w3t, b3 = params
    x = jnp.concatenate([t, s], axis=1)               # (N, 2)
    h = jnp.maximum(x @ w1.T + b1.T, 0.0)
    if bf16_layer2:
        h2 = jnp.dot(h.astype(jnp.bfloat16), w2.T.astype(jnp.bfloat16),
                     preferred_element_type=jnp.float32)
    else:
        h2 = h @ w2.T
    h2 = jnp.maximum(h2 + b2.T, 0.0)
    return h2 @ w3t + b3                              # (N, 1)


if __name__ == "__main__":
    key = jax.random.PRNGKey(0)
    kp, kd = jax.random.split(key)
    params = init_params(kp)

    # N=200: single small tile (padding path); N=2500: split into 2 grid steps
    # (v7x megacore path); N=20000: multiple full-size tiles.
    for N in (200, 2500, 20000):
        kt_i, ks_i = jax.random.split(jax.random.fold_in(kd, N))
        t = jax.random.uniform(kt_i, (N, 1), jnp.float32)           # time
        s = jax.random.uniform(ks_i, (N, 1), jnp.float32) * 100.0   # spot price

        out = jax.block_until_ready(net_forward(t, s, params))
        assert out.shape == (N, 1)

        # Tight check vs. a reference that uses the same bf16 layer-2 numerics.
        ref_bf16 = net_reference(t, s, params, bf16_layer2=True)
        assert jnp.allclose(out, ref_bf16, rtol=1e-4, atol=1e-2), \
            f"kernel vs bf16-matched reference mismatch at N={N}"

        # Loose check vs. exact f32 PyTorch math (only bf16 MXU rounding differs).
        ref_f32 = net_reference(t, s, params, bf16_layer2=False)
        assert jnp.allclose(out, ref_f32, rtol=2e-2, atol=1.0), \
            f"kernel vs f32 reference mismatch at N={N}"

    print("KERNEL_OK")
</pallas_src>

<mosaic_0001>
module attributes {stable_mosaic.version = 11 : i64} {
  func.func @mlp_kernel(%arg0: i32, %arg1: memref<2x256xf32, #tpu.memory_space<vmem>>, %arg2: memref<32x2xf32, #tpu.memory_space<vmem>>, %arg3: memref<32x1xf32, #tpu.memory_space<vmem>>, %arg4: memref<32x32xbf16, #tpu.memory_space<vmem>>, %arg5: memref<32x1xf32, #tpu.memory_space<vmem>>, %arg6: memref<32x1xf32, #tpu.memory_space<vmem>>, %arg7: memref<1x1xf32, #tpu.memory_space<vmem>>, %arg8: memref<1x256xf32, #tpu.memory_space<vmem>>) attributes {dimension_semantics = [#tpu.dimension_semantics<parallel>], iteration_bounds = array<i64: 1>, scalar_prefetch = 0 : i64, scratch_operands = 0 : i64, tpu.core_type = #tpu.core_type<tc>, window_params = [{transform_indices = @transform_0, window_bounds = array<i64: 2, 256>}, {pipeline_mode = #tpu.pipeline_mode<synchronous>, transform_indices = @transform_1, window_bounds = array<i64: 32, 2>}, {pipeline_mode = #tpu.pipeline_mode<synchronous>, transform_indices = @transform_2, window_bounds = array<i64: 32, 1>}, {pipeline_mode = #tpu.pipeline_mode<synchronous>, transform_indices = @transform_3, window_bounds = array<i64: 32, 32>}, {pipeline_mode = #tpu.pipeline_mode<synchronous>, transform_indices = @transform_4, window_bounds = array<i64: 32, 1>}, {pipeline_mode = #tpu.pipeline_mode<synchronous>, transform_indices = @transform_5, window_bounds = array<i64: 32, 1>}, {pipeline_mode = #tpu.pipeline_mode<synchronous>, transform_indices = @transform_6, window_bounds = array<i64: 1, 1>}, {transform_indices = @transform_7, window_bounds = array<i64: 1, 256>}]} {
    %c0 = arith.constant 0 : index
    %c0_0 = arith.constant 0 : index
    %0 = vector.load %arg1[%c0, %c0_0] : memref<2x256xf32, #tpu.memory_space<vmem>>, vector<2x256xf32>
    %c0_1 = arith.constant 0 : index
    %c0_2 = arith.constant 0 : index
    %1 = vector.load %arg2[%c0_1, %c0_2] : memref<32x2xf32, #tpu.memory_space<vmem>>, vector<32x1xf32>
    %2 = vector.extract_strided_slice %0 {offsets = [0, 0], sizes = [1, 256], strides = [1, 1]} : vector<2x256xf32> to vector<1x256xf32>
    %3 = vector.broadcast %1 : vector<32x1xf32> to vector<32x256xf32>
    %4 = vector.broadcast %2 : vector<1x256xf32> to vector<32x256xf32>
    %5 = arith.mulf %3, %4 : vector<32x256xf32>
    %c0_3 = arith.constant 0 : index
    %c1 = arith.constant 1 : index
    %6 = vector.load %arg2[%c0_3, %c1] : memref<32x2xf32, #tpu.memory_space<vmem>>, vector<32x1xf32>
    %7 = vector.extract_strided_slice %0 {offsets = [1, 0], sizes = [1, 256], strides = [1, 1]} : vector<2x256xf32> to vector<1x256xf32>
    %8 = vector.broadcast %6 : vector<32x1xf32> to vector<32x256xf32>
    %9 = vector.broadcast %7 : vector<1x256xf32> to vector<32x256xf32>
    %10 = arith.mulf %8, %9 : vector<32x256xf32>
    %11 = arith.addf %5, %10 : vector<32x256xf32>
    %c0_4 = arith.constant 0 : index
    %c0_5 = arith.constant 0 : index
    %12 = vector.load %arg3[%c0_4, %c0_5] : memref<32x1xf32, #tpu.memory_space<vmem>>, vector<32x1xf32>
    %13 = vector.broadcast %12 : vector<32x1xf32> to vector<32x256xf32>
    %14 = arith.addf %11, %13 : vector<32x256xf32>
    %cst = arith.constant 0.000000e+00 : f32
    %15 = vector.broadcast %cst : f32 to vector<32x256xf32>
    %16 = arith.maximumf %14, %15 : vector<32x256xf32>
    %c0_6 = arith.constant 0 : index
    %c0_7 = arith.constant 0 : index
    %17 = vector.load %arg4[%c0_6, %c0_7] : memref<32x32xbf16, #tpu.memory_space<vmem>>, vector<32x32xbf16>
    %18 = arith.truncf %16 : vector<32x256xf32> to vector<32x256xbf16>
    %cst_8 = arith.constant dense<0.000000e+00> : vector<32x256xf32>
    %19 = tpu.matmul %17, %18, %cst_8 {dimension_numbers = #tpu.dot_dimension_numbers<[1], [0], [0], [1], [0, 0, 1, 1], [], []>} : vector<32x32xbf16>, vector<32x256xbf16>, vector<32x256xf32> -> vector<32x256xf32>
    %c0_9 = arith.constant 0 : index
    %c0_10 = arith.constant 0 : index
    %20 = vector.load %arg5[%c0_9, %c0_10] : memref<32x1xf32, #tpu.memory_space<vmem>>, vector<32x1xf32>
    %21 = vector.broadcast %20 : vector<32x1xf32> to vector<32x256xf32>
    %22 = arith.addf %19, %21 : vector<32x256xf32>
    %cst_11 = arith.constant 0.000000e+00 : f32
    %23 = vector.broadcast %cst_11 : f32 to vector<32x256xf32>
    %24 = arith.maximumf %22, %23 : vector<32x256xf32>
    %c0_12 = arith.constant 0 : index
    %c0_13 = arith.constant 0 : index
    %25 = vector.load %arg6[%c0_12, %c0_13] : memref<32x1xf32, #tpu.memory_space<vmem>>, vector<32x1xf32>
    %26 = vector.broadcast %25 : vector<32x1xf32> to vector<32x256xf32>
    %27 = arith.mulf %26, %24 : vector<32x256xf32>
    %cst_14 = arith.constant dense<0.000000e+00> : vector<256xf32>
    %28 = vector.multi_reduction <add>, %27, %cst_14 [0] : vector<32x256xf32> to vector<256xf32>
    %29 = vector.shape_cast %28 : vector<256xf32> to vector<1x256xf32>
    %c0_15 = arith.constant 0 : index
    %c0_16 = arith.constant 0 : index
    %30 = vector.load %arg7[%c0_15, %c0_16] : memref<1x1xf32, #tpu.memory_space<vmem>>, vector<1x1xf32>
    %31 = vector.broadcast %30 : vector<1x1xf32> to vector<1x256xf32>
    %32 = arith.addf %29, %31 : vector<1x256xf32>
    %c0_17 = arith.constant 0 : index
    %c0_18 = arith.constant 0 : index
    %33 = vector.load %arg8[%c0_17, %c0_18] : memref<1x256xf32, #tpu.memory_space<vmem>>, vector<1x256xf32>
    tpu.vector_store %arg8[%c0_17, %c0_18], %32 {strides = array<i32>} : memref<1x256xf32, #tpu.memory_space<vmem>>, vector<1x256xf32>,
    return
  }
  func.func @transform_0(%arg0: i32) -> (i32, i32) {
    %c0_i32 = arith.constant 0 : i32
    %c0_i32_0 = arith.constant 0 : i32
    return %c0_i32, %arg0 : i32, i32
  }
  func.func @transform_1(%arg0: i32) -> (i32, i32) {
    %c0_i32 = arith.constant 0 : i32
    %c0_i32_0 = arith.constant 0 : i32
    %c0_i32_1 = arith.constant 0 : i32
    return %c0_i32, %c0_i32_0 : i32, i32
  }
  func.func @transform_2(%arg0: i32) -> (i32, i32) {
    %c0_i32 = arith.constant 0 : i32
    %c0_i32_0 = arith.constant 0 : i32
    %c0_i32_1 = arith.constant 0 : i32
    return %c0_i32, %c0_i32_0 : i32, i32
  }
  func.func @transform_3(%arg0: i32) -> (i32, i32) {
    %c0_i32 = arith.constant 0 : i32
    %c0_i32_0 = arith.constant 0 : i32
    %c0_i32_1 = arith.constant 0 : i32
    return %c0_i32, %c0_i32_0 : i32, i32
  }
  func.func @transform_4(%arg0: i32) -> (i32, i32) {
    %c0_i32 = arith.constant 0 : i32
    %c0_i32_0 = arith.constant 0 : i32
    %c0_i32_1 = arith.constant 0 : i32
    return %c0_i32, %c0_i32_0 : i32, i32
  }
  func.func @transform_5(%arg0: i32) -> (i32, i32) {
    %c0_i32 = arith.constant 0 : i32
    %c0_i32_0 = arith.constant 0 : i32
    %c0_i32_1 = arith.constant 0 : i32
    return %c0_i32, %c0_i32_0 : i32, i32
  }
  func.func @transform_6(%arg0: i32) -> (i32, i32) {
    %c0_i32 = arith.constant 0 : i32
    %c0_i32_0 = arith.constant 0 : i32
    %c0_i32_1 = arith.constant 0 : i32
    return %c0_i32, %c0_i32_0 : i32, i32
  }
  func.func @transform_7(%arg0: i32) -> (i32, i32) {
    %c0_i32 = arith.constant 0 : i32
    %c0_i32_0 = arith.constant 0 : i32
    return %c0_i32, %arg0 : i32, i32
  }
}

</mosaic_0001>

<llo_original>
// kernel: tpu_custom_call.1
$region0: #{tpu_custom_call.1}
  #allocation0 [shape = 'u32[]', space=smem, size = 0x4, offset = 0x4, fixed_abs, tag = 'smem constant byte address 0x4 - core index']
  #allocation1 [shape = 'u32[144,128]{1,0:T(1,128)}', space=vmem, size = 0x12000, scoped, tag = 'internal scratch']
  #allocation2 [shape = 'f32[1,1]{1,0:T(1,128)S(1)}', space=vmem, size = 0x200, scoped, tag = 'scoped memory for tpu_custom_call.1']
  %s0 = inlined_call_operand.vmem [shape: f32[2,256], index: 0, kind: input, shape index: {}]
  %s1 = inlined_call_operand.vmem [shape: f32[32,2], index: 1, kind: input, shape index: {}]
  %s2 = inlined_call_operand.vmem [shape: f32[32,1], index: 2, kind: input, shape index: {}]
  %s3 = inlined_call_operand.vmem [shape: bf16[32,32], index: 3, kind: input, shape index: {}]
  %s4 = inlined_call_operand.vmem [shape: f32[32,1], index: 4, kind: input, shape index: {}]
  %s5 = inlined_call_operand.vmem [shape: f32[32,1], index: 5, kind: input, shape index: {}]
  %s6 = inlined_call_operand.<no memory space> [shape: f32[1,1], index: 6, kind: input, shape index: {}]
  %s7 = inlined_call_operand.hbm [shape: f32[1,256], index: 7, kind: output, shape index: {}]
  %s8 = sld [smem:[#allocation0]]
  $region38: #{tpu_custom_call.1} parent=0
    _
  %s10 = ssub.s32 1, %s8
  %s11 = scalar_select 0, %s10, %s8
  %v12 = vstv %s6
  %13 = vst [vmem:[#allocation2] sm:$0x1] %v12
  $region1: #{tpu_custom_call.1} parent=0
    #allocation3 [shape = 'u8[1024]{0}', space=vmem, size = 0x400, scoped, tag = 'output window, operand 0, single buffered']
    #allocation4 [shape = 's32[1]{0}', space=sflag, size = 0x4, scoped, tag = 'scoped memory for tpu_custom_call.1']
    %14 = vsyncpa [#allocation4], 0
    // Predicated region
    $region2: #{tpu_custom_call.1} parent=1 // pred_check
      _
    $region3: #{tpu_custom_call.1} parent=1 // pred_check_branch
      %16 = sbr.rel (0) target = $region5
    $region4: #{tpu_custom_call.1} parent=1 // pred_region
      _
    $region5: #{tpu_custom_call.1} parent=1 // pred_fallthru
      _
    // Predicated region
    $region6: #{tpu_custom_call.1} parent=1 // pred_check
      _
    $region7: #{tpu_custom_call.1} parent=1 // pred_check_branch
      %18 = sbr.rel (0) target = $region9
    $region8: #{tpu_custom_call.1} parent=1 // pred_region
      _
    $region9: #{tpu_custom_call.1} parent=1 // pred_fallthru
      _
    // Predicated region
    $region10: #{tpu_custom_call.1} parent=1 // pred_check
      _
    $region11: #{tpu_custom_call.1} parent=1 // pred_check_branch
      %20 = sbr.rel (0) target = $region13
    $region12: #{tpu_custom_call.1} parent=1 // pred_region
      _
    $region13: #{tpu_custom_call.1} parent=1 // pred_fallthru
      _
    // Predicated region
    $region14: #{tpu_custom_call.1} parent=1 // pred_check
      _
    $region15: #{tpu_custom_call.1} parent=1 // pred_check_branch
      %22 = sbr.rel (0) target = $region17
    $region16: #{tpu_custom_call.1} parent=1 // pred_region
      _
    $region17: #{tpu_custom_call.1} parent=1 // pred_fallthru
      _
    // Predicated region
    $region18: #{tpu_custom_call.1} parent=1 // pred_check
      _
    $region19: #{tpu_custom_call.1} parent=1 // pred_check_branch
      %24 = sbr.rel (0) target = $region21
    $region20: #{tpu_custom_call.1} parent=1 // pred_region
      _
    $region21: #{tpu_custom_call.1} parent=1 // pred_fallthru
      _
    // Predicated region
    $region22: #{tpu_custom_call.1} parent=1 // pred_check
      _
    $region23: #{tpu_custom_call.1} parent=1 // pred_check_branch
      %26 = sbr.rel (0) target = $region25
    $region24: #{tpu_custom_call.1} parent=1 // pred_region
      _
    $region25: #{tpu_custom_call.1} parent=1 // pred_fallthru
      _
    // Predicated region
    $region26: #{tpu_custom_call.1} parent=1 // pred_check
      _
    $region27: #{tpu_custom_call.1} parent=1 // pred_check_branch
      %28 = sbr.rel (0) target = $region29
    $region28: #{tpu_custom_call.1} parent=1 // pred_region
      _
    $region29: #{tpu_custom_call.1} parent=1 // pred_fallthru
      _
    %v30 = vld [vmem:[%s0] sm:$0xf]
    %v31 = vld [vmem:[%s1] sm:$0xff]
    %v32 = vld [vmem:[%s1 + $0x8] sm:$0xff]
    %v33 = vld [vmem:[%s1 + $0x10] sm:$0xff]
    %v34 = vld [vmem:[%s1 + $0x18] sm:$0xff]
    %36 = vset.pattern.permute.xlu0 0
    %37 = vperm.xlu0 %36, %v31
    %v38 = vpop.permute.xlu0 %37
    %41 = vset.pattern.permute.xlu0 0
    %42 = vperm.xlu0 %41, %v32
    %v43 = vpop.permute.xlu0 %42
    %46 = vset.pattern.permute.xlu0 0
    %47 = vperm.xlu0 %46, %v33
    %v48 = vpop.permute.xlu0 %47
    %51 = vset.pattern.permute.xlu0 0
    %52 = vperm.xlu0 %51, %v34
    %v53 = vpop.permute.xlu0 %52
    %v56 = vlaneseq
    %v57 = vshrl.u32 %v56, 7
    %v58 = vsub.s32 0, %v57
    %v59 = vrot.slane %v30, %v58
    %v60 = vlaneseq
    %v61 = vshrl.u32 %v60, 7
    %v62 = vsub.s32 2, %v61
    %v63 = vrot.slane %v30, %v62
    %v66 = vlaneseq
    %v67 = vshrl.u32 %v66, 7
    %v68 = vsub.s32 0, %v67
    %v69 = vrot.slane %v59, %v68
    %v70 = vlaneseq
    %v71 = vshrl.u32 %v70, 7
    %v72 = vsub.s32 0, %v71
    %v73 = vrot.slane %v63, %v72
    %v74 = vmul.f32 %v38, %v69
    %v75 = vmul.f32 %v38, %v73
    %v76 = vmul.f32 %v43, %v69
    %v77 = vmul.f32 %v43, %v73
    %v78 = vmul.f32 %v48, %v69
    %v79 = vmul.f32 %v48, %v73
    %v80 = vmul.f32 %v53, %v69
    %v81 = vmul.f32 %v53, %v73
    %82 = vset.pattern.permute.xlu0 1
    %83 = vperm.xlu0 %82, %v31
    %v84 = vpop.permute.xlu0 %83
    %86 = vset.pattern.permute.xlu0 1
    %87 = vperm.xlu0 %86, %v32
    %v88 = vpop.permute.xlu0 %87
    %90 = vset.pattern.permute.xlu0 1
    %91 = vperm.xlu0 %90, %v33
    %v92 = vpop.permute.xlu0 %91
    %94 = vset.pattern.permute.xlu0 1
    %95 = vperm.xlu0 %94, %v34
    %v96 = vpop.permute.xlu0 %95
    %v98 = vlaneseq
    %v99 = vshrl.u32 %v98, 7
    %v100 = vsub.s32 1, %v99
    %v101 = vrot.slane %v30, %v100
    %v102 = vlaneseq
    %v103 = vshrl.u32 %v102, 7
    %v104 = vsub.s32 3, %v103
    %v105 = vrot.slane %v30, %v104
    %v108 = vlaneseq
    %v109 = vshrl.u32 %v108, 7
    %v110 = vsub.s32 1, %v109
    %v111 = vrot.slane %v101, %v110
    %v112 = vlaneseq
    %v113 = vshrl.u32 %v112, 7
    %v114 = vsub.s32 1, %v113
    %v115 = vrot.slane %v105, %v114
    %v116 = vmul.f32 %v84, %v111
    %v117 = vmul.f32 %v84, %v115
    %v118 = vmul.f32 %v88, %v111
    %v119 = vmul.f32 %v88, %v115
    %v120 = vmul.f32 %v92, %v111
    %v121 = vmul.f32 %v92, %v115
    %v122 = vmul.f32 %v96, %v111
    %v123 = vmul.f32 %v96, %v115
    %v124 = vadd.f32 %v74, %v116
    %v125 = vadd.f32 %v75, %v117
    %v126 = vadd.f32 %v76, %v118
    %v127 = vadd.f32 %v77, %v119
    %v128 = vadd.f32 %v78, %v120
    %v129 = vadd.f32 %v79, %v121
    %v130 = vadd.f32 %v80, %v122
    %v131 = vadd.f32 %v81, %v123
    %v132 = vld [vmem:[%s2] sm:$0xff]
    %v133 = vld [vmem:[%s2 + $0x8] sm:$0xff]
    %v134 = vld [vmem:[%s2 + $0x10] sm:$0xff]
    %v135 = vld [vmem:[%s2 + $0x18] sm:$0xff]
    %137 = vset.pattern.permute.xlu0 0
    %138 = vperm.xlu0 %137, %v132
    %v139 = vpop.permute.xlu0 %138
    %142 = vset.pattern.permute.xlu0 0
    %143 = vperm.xlu0 %142, %v133
    %v144 = vpop.permute.xlu0 %143
    %147 = vset.pattern.permute.xlu0 0
    %148 = vperm.xlu0 %147, %v134
    %v149 = vpop.permute.xlu0 %148
    %152 = vset.pattern.permute.xlu0 0
    %153 = vperm.xlu0 %152, %v135
    %v154 = vpop.permute.xlu0 %153
    %v156 = vadd.f32 %v124, %v139
    %v157 = vadd.f32 %v125, %v139
    %v158 = vadd.f32 %v126, %v144
    %v159 = vadd.f32 %v127, %v144
    %v160 = vadd.f32 %v128, %v149
    %v161 = vadd.f32 %v129, %v149
    %v162 = vadd.f32 %v130, %v154
    %v163 = vadd.f32 %v131, %v154
    %v164 = vmax.f32 %v156, 0.0
    %v165 = vmax.f32 %v157, 0.0
    %v166 = vmax.f32 %v158, 0.0
    %v167 = vmax.f32 %v159, 0.0
    %v168 = vmax.f32 %v160, 0.0
    %v169 = vmax.f32 %v161, 0.0
    %v170 = vmax.f32 %v162, 0.0
    %v171 = vmax.f32 %v163, 0.0
    %v172 = vld [vmem:[%s3] sm:$0xf]
    %v173 = vld [vmem:[%s3 + $0x4] sm:$0xf]
    %v174 = vld [vmem:[%s3 + $0x8] sm:$0xf]
    %v175 = vld [vmem:[%s3 + $0xc] sm:$0xf]
    %v176 = vpack.c.bf16 %v166, %v164
    %v177 = vpack.c.bf16 %v167, %v165
    %v178 = vpack.c.bf16 %v170, %v168
    %v179 = vpack.c.bf16 %v171, %v169
    %v180 = vld [vmem:[%s4] sm:$0xff]
    %v181 = vld [vmem:[%s4 + $0x8] sm:$0xff]
    %v182 = vld [vmem:[%s4 + $0x10] sm:$0xff]
    %v183 = vld [vmem:[%s4 + $0x18] sm:$0xff]
    %185 = vset.pattern.permute.xlu0 0
    %186 = vperm.xlu0 %185, %v180
    %v187 = vpop.permute.xlu0 %186
    %190 = vset.pattern.permute.xlu0 0
    %191 = vperm.xlu0 %190, %v181
    %v192 = vpop.permute.xlu0 %191
    %195 = vset.pattern.permute.xlu0 0
    %196 = vperm.xlu0 %195, %v182
    %v197 = vpop.permute.xlu0 %196
    %200 = vset.pattern.permute.xlu0 0
    %201 = vperm.xlu0 %200, %v183
    %v202 = vpop.permute.xlu0 %201
    %v208 = vunpack.c.l.b16 %v172
    %v209 = vunpack.c.l.b16 %v173
    %v210 = vunpack.c.l.b16 %v174
    %v211 = vunpack.c.l.b16 %v175
    %v212 = vpack.c.b16 %v209, %v208
    %v213 = vpack.c.b16 %v211, %v210
    %vm214 = vcmask 261120
    %v216 = vsel %vm214, %v212, 0
    %v219 = vsel %vm214, %v213, 0
    %221 = vmatprep.subr.bf16.mxu0 %v177
    %222 = vmatpush1.bf16.msra.mxu0 %v176
    %223 = vmatprep.subr.bf16.mxu0 %v179
    %224 = vmatpush1.bf16.msra.mxu0 %v178
    %225 = vmatprep.subr.bf16.mxu0 0
    %226 = vmatpush1.bf16.msra.mxu0 0
    %227 = vmatprep.subr.bf16.mxu0 0
    %228 = vmatpush1.bf16.msra.mxu0 0
    %229 = vmatprep.subr.bf16.mxu0 0
    %230 = vmatpush1.bf16.msra.mxu0 0
    %231 = vmatprep.subr.bf16.mxu0 0
    %232 = vmatpush1.bf16.msra.mxu0 0
    %233 = vmatprep.subr.bf16.mxu0 0
    %234 = vmatpush1.bf16.msra.mxu0 0
    %235 = vmatprep.subr.bf16.mxu0 0
    %236 = vmatpush1.bf16.msra.mxu0 0
    %237 = vmatprep.subr.bf16.mxu0 0
    %238 = vmatpush1.bf16.msra.mxu0 0
    %239 = vmatprep.subr.bf16.mxu0 0
    %240 = vmatpush1.bf16.msra.mxu0 0
    %241 = vmatprep.subr.bf16.mxu0 0
    %242 = vmatpush1.bf16.msra.mxu0 0
    %243 = vmatprep.subr.bf16.mxu0 0
    %244 = vmatpush1.bf16.msra.mxu0 0
    %245 = vmatprep.subr.bf16.mxu0 0
    %246 = vmatpush1.bf16.msra.mxu0 0
    %247 = vmatprep.subr.bf16.mxu0 0
    %248 = vmatpush1.bf16.msra.mxu0 0
    %249 = vmatprep.subr.bf16.mxu0 0
    %250 = vmatpush1.bf16.msra.mxu0 0
    %251 = vmatprep.subr.bf16.mxu0 0
    %252 = vmatpush1.bf16.msra.mxu0 0
    %253 = vmatprep.mubr.bf16.mxu0 0
    %254 = vmatmul.mubr.bf16.gmra.mrb[0].mxu0 %v216
    %v255 = vpop.f32.mrb[0].mxu0
    %v256 = vadd.f32 %v187, %v255
    %v257 = vpop.f32.mrb[0].mxu0
    %v258 = vadd.f32 %v187, %v257
    %v259 = vpop.f32.mrb[0].mxu0
    %v260 = vadd.f32 %v192, %v259
    %v261 = vpop.f32.mrb[0].mxu0
    %v262 = vadd.f32 %v192, %v261
    %263 = vmatprep.mubr.bf16.mxu0 0
    %264 = vmatmul.mubr.bf16.gmra.mrb[0].mxu0 %v219
    %v265 = vpop.f32.mrb[0].mxu0
    %v266 = vadd.f32 %v197, %v265
    %v267 = vpop.f32.mrb[0].mxu0
    %v268 = vadd.f32 %v197, %v267
    %v269 = vpop.f32.mrb[0].mxu0
    %v270 = vadd.f32 %v202, %v269
    %v271 = vpop.f32.mrb[0].mxu0
    %v272 = vadd.f32 %v202, %v271
    %273 = vdwg.mxu0
    %v274 = vmax.f32 %v256, 0.0
    %v275 = vmax.f32 %v258, 0.0
    %v276 = vmax.f32 %v260, 0.0
    %v277 = vmax.f32 %v262, 0.0
    %v278 = vmax.f32 %v266, 0.0
    %v279 = vmax.f32 %v268, 0.0
    %v280 = vmax.f32 %v270, 0.0
    %v281 = vmax.f32 %v272, 0.0
    %v282 = vld [vmem:[%s5] sm:$0xff]
    %v283 = vld [vmem:[%s5 + $0x8] sm:$0xff]
    %v284 = vld [vmem:[%s5 + $0x10] sm:$0xff]
    %v285 = vld [vmem:[%s5 + $0x18] sm:$0xff]
    %287 = vset.pattern.permute.xlu0 0
    %288 = vperm.xlu0 %287, %v282
    %v289 = vpop.permute.xlu0 %288
    %292 = vset.pattern.permute.xlu0 0
    %293 = vperm.xlu0 %292, %v283
    %v294 = vpop.permute.xlu0 %293
    %297 = vset.pattern.permute.xlu0 0
    %298 = vperm.xlu0 %297, %v284
    %v299 = vpop.permute.xlu0 %298
    %302 = vset.pattern.permute.xlu0 0
    %303 = vperm.xlu0 %302, %v285
    %v304 = vpop.permute.xlu0 %303
    %v306 = vmul.f32 %v289, %v274
    %v307 = vmul.f32 %v289, %v275
    %v308 = vmul.f32 %v294, %v276
    %v309 = vmul.f32 %v294, %v277
    %v310 = vmul.f32 %v299, %v278
    %v311 = vmul.f32 %v299, %v279
    %v312 = vmul.f32 %v304, %v280
    %v313 = vmul.f32 %v304, %v281
    %v314 = vadd.f32 %v306, %v308
    %v315 = vadd.f32 %v314, %v310
    %v316 = vadd.f32 %v315, %v312
    %v317 = vrot.slane %v316, 4
    %v318 = vadd.f32 %v316, %v317
    %v319 = vrot.slane %v318, 2
    %v320 = vadd.f32 %v318, %v319
    %v321 = vrot.slane %v320, 1
    %v322 = vadd.f32 %v320, %v321
    %v323 = vadd.f32 %v307, %v309
    %v324 = vadd.f32 %v323, %v311
    %v325 = vadd.f32 %v324, %v313
    %v326 = vrot.slane %v325, 4
    %v327 = vadd.f32 %v325, %v326
    %v328 = vrot.slane %v327, 2
    %v329 = vadd.f32 %v327, %v328
    %v330 = vrot.slane %v329, 1
    %v331 = vadd.f32 %v329, %v330
    %v332 = vld [vmem:[#allocation2] sm:$0x1]
    %334 = vset.pattern.permute.xlu0 0
    %335 = vperm.xlu0 %334, %v332
    %v336 = vpop.permute.xlu0 %335
    %v338 = vlaneseq
    %v339 = vshrl.u32 %v338, 7
    %v340 = vsub.s32 0, %v339
    %v341 = vrot.slane %v336, %v340
    %v342 = vadd.f32 %v322, %v341
    %v343 = vadd.f32 %v331, %v341
    %v346 = vcombine.low %v342, %v343
    %v348 = vunpack.c.l.s4 1966171168
    %v349 = vunpack.c.0.s8 %v348
    %v350 = vlaneseq
    %v351 = vshrl.u32 %v350, 7
    %v352 = vsub.s32 %v349, %v351
    %v353 = vrot.slane %v346, %v352
    %v355 = vunpack.c.l.s4 1966171168
    %v356 = vunpack.c.0.s8 %v355
    %v357 = vlaneseq
    %v358 = vshrl.u32 %v357, 7
    %v359 = vsub.s32 %v356, %v358
    %v360 = vrot.slane %v353, %v359
    %v362 = vlaneseq
    %vm363 = vcmp.ge.s32.totalorder %v362, 0
    %vm364 = vcmp.lt.s32.totalorder %v362, 256
    %vm365 = vmand %vm363, %vm364
    %366 = vst.msk [vmem:[#allocation3] sm:$0x3] %vm365, %v360
    // Predicated region
    $region30: #{tpu_custom_call.1} parent=1 // pred_check
      _
    $region31: #{tpu_custom_call.1} parent=1 // pred_check_branch
      %368 = sbr.rel (0) target = $region33
    $region32: #{tpu_custom_call.1} parent=1 // pred_region
      %s370 = ssub.s32 32, 32
      %371 = vsyncadd [#allocation4], %s370
      %s373 = sshll.u32 [#allocation3], 4
      %s374 = int_to_ptr.vmem [resolvable:$true] %s373
      %376 = dma.vmem_to_hbm [thread:$0]  %s374, 32, %s7, [#allocation4]
    $region33: #{tpu_custom_call.1} parent=1 // pred_fallthru
      _
    // Predicated region
    $region34: #{tpu_custom_call.1} parent=1 // pred_check
      _
    $region35: #{tpu_custom_call.1} parent=1 // pred_check_branch
      %378 = sbr.rel (0) target = $region37
    $region36: #{tpu_custom_call.1} parent=1 // pred_region
      %379 = dma.done [#allocation4], 32
    $region37: #{tpu_custom_call.1} parent=1 // pred_fallthru
      _
    %380 = vsyncpa [#allocation4], 1

</llo_original>
